<compile_context>
chip_gen: v5e
topology: v5e:2x2
jax: 0.10.0
libtpu: 0.0.40
codegen_flags: <defaults>
</compile_context>

<pallas_src>
import math
from functools import partial

import jax
import jax.numpy as jnp
from jax import lax
from jax.experimental import pallas as pl
from jax.experimental.pallas import tpu as pltpu


# ----------------------------------------------------------------------------
# Pallas kernel: three fused matmul+epilogue stages on an MT-row pixel tile
# ----------------------------------------------------------------------------
def head_kernel(x_ref, w1_ref, b1_ref, w2_ref, b2_ref, w3_ref, b3_ref, o_ref):
    # x_ref : (1, MT, 9*Cin)   im2col'd activations (compute dtype)
    # w1_ref: (9*Cin, Ch)      3x3 conv weight with BN1 scale folded in
    # b1_ref: (1, Ch)          BN1 bias (f32)
    # w2_ref: (Ch, 4*Ch)       ConvT#1 as per-pixel matmul, BN2 scale folded in
    # b2_ref: (1, 4*Ch)        ConvT#1 bias * s2 + BN2 bias (f32)
    # w3_ref: (4*Ch, 16*Cp)    ConvT#2, block-diagonal, zero-padded lanes
    # b3_ref: (1, 16*Cp)       ConvT#2 bias, zero-padded (f32)
    # o_ref : (1, MT, 16*Cp)   output tile (lane-dense: 16*Cp % 128 == 0),
    #                          stored in o_ref.dtype (bf16 default, f32 exact)
    cdt = w1_ref.dtype

    # Conv2d(3x3, pad=1) + BN1 + ReLU  -- single K=9*Cin MXU matmul
    h = jnp.dot(x_ref[0], w1_ref[...], preferred_element_type=jnp.float32)
    h = jnp.maximum(h + b1_ref[...], 0.0)

    # ConvTranspose2d #1 (k=2, s=2) + BN2 + ReLU  -- per-pixel channel expand
    h = jnp.dot(h.astype(cdt), w2_ref[...], preferred_element_type=jnp.float32)
    h = jnp.maximum(h + b2_ref[...], 0.0)

    # ConvTranspose2d #2 (k=2, s=2)  -- block-diagonal per-pixel matmul
    h = jnp.dot(h.astype(cdt), w3_ref[...], preferred_element_type=jnp.float32)
    o_ref[0] = (h + b3_ref[...]).astype(o_ref.dtype)


def _pick_row_tile(M, N, target=2048):
    """Largest multiple-of-16 divisor of M <= target, keeping >=4 grid steps
    (falling back to >=2, then the biggest tile) so v7x megacore sharding and
    double-buffering stay effective even at N=1..2."""
    cands = [d for d in range(min(M, target), 15, -1) if M % d == 0 and d % 16 == 0]
    if not cands:
        return M
    for min_steps in (4, 2):
        for d in cands:
            if N * (M // d) >= min_steps:
                return d
    return cands[0]


def _lanes(c):
    return ((c + 127) // 128) * 128


@partial(jax.jit, static_argnames=("eps", "compute_dtype", "store_dtype",
                                   "row_tile", "buffer_count"))
def single_det_forward(x_nchw, params, eps=1e-5,
                       compute_dtype=jnp.bfloat16, store_dtype=jnp.bfloat16,
                       row_tile=None, buffer_count=2):
    """Forward of single_det.header. x_nchw: (N, Cin, H, W) f32 -> NCHW f32 out."""
    w1 = params["w1"]                        # (Ch, Cin, 3, 3)   Conv2d weight
    wt1, bt1 = params["wt1"], params["bt1"]  # (Ch, Ch, 2, 2), (Ch,)
    wt2, bt2 = params["wt2"], params["bt2"]  # (Ch, Cout, 2, 2), (Cout,)
    g1, be1, m1, v1 = params["bn1"]
    g2, be2, m2, v2 = params["bn2"]

    N, Cin, H, W = x_nchw.shape
    Ch = w1.shape[0]
    Cout = wt2.shape[1]
    M = H * W
    Cp = ((Cout + 7) // 8) * 8               # pad so 16*Cp is a multiple of 128
    MT = _pick_row_tile(M, N) if row_tile is None else row_tile
    assert M % MT == 0 and (MT % 16 == 0 or MT == M), (M, MT)
    f32 = jnp.float32

    # ---- glue (fused under jit): im2col (N, M, 9*Cin), order (kh, kw, cin) ---
    x = jnp.transpose(x_nchw, (0, 2, 3, 1)).astype(f32)          # NHWC
    xp = jnp.pad(x, ((0, 0), (1, 1), (1, 1), (0, 0)))
    x_cols = jnp.concatenate(
        [xp[:, dh:dh + H, dw:dw + W, :] for dh in range(3) for dw in range(3)],
        axis=-1).reshape(N, M, 9 * Cin).astype(compute_dtype)

    # ---- glue: fold BatchNorm (inference) into the matmul weights ------------
    s1 = g1 / jnp.sqrt(v1 + eps)
    w1f = (jnp.transpose(w1, (2, 3, 1, 0)).reshape(9 * Cin, Ch)
           * s1[None, :]).astype(compute_dtype)
    b1f = (be1 - m1 * s1).reshape(1, Ch).astype(f32)

    # ConvTranspose #1 as matmul; output column order (kh, kw, c). BN2 folded.
    s2 = g2 / jnp.sqrt(v2 + eps)
    s2_t = jnp.tile(s2, 4)
    w2f = (jnp.transpose(wt1, (0, 2, 3, 1)).reshape(Ch, 4 * Ch)
           * s2_t[None, :]).astype(compute_dtype)
    b2f = (jnp.tile(bt1, 4) * s2_t + jnp.tile(be2 - m2 * s2, 4)
           ).reshape(1, 4 * Ch).astype(f32)

    # ConvTranspose #2: block-diagonal over the (kh, kw) block; zero-padded to
    # Cp output channels so the flat output is exactly 16*Cp lanes wide.
    w3s = jnp.transpose(wt2, (0, 2, 3, 1))                       # (Ch, kh2, kw2, Cout)
    w3s = jnp.pad(w3s, ((0, 0), (0, 0), (0, 0), (0, Cp - Cout))).reshape(Ch, 4 * Cp)
    w3f = jnp.zeros((4 * Ch, 16 * Cp), f32)
    for b in range(4):
        w3f = w3f.at[b * Ch:(b + 1) * Ch, b * 4 * Cp:(b + 1) * 4 * Cp].set(w3s)
    w3f = w3f.astype(compute_dtype)
    b3f = jnp.tile(jnp.pad(bt2, (0, Cp - Cout)), 16).reshape(1, 16 * Cp).astype(f32)

    # ---- VMEM budget: buffered I/O tiles + f32 intermediates + weights -------
    cbytes = jnp.dtype(compute_dtype).itemsize
    obytes = jnp.dtype(store_dtype).itemsize
    bufs = max(2, buffer_count)
    in_tile = MT * _lanes(9 * Cin) * cbytes
    out_tile = MT * 16 * Cp * obytes
    wgt_bytes = 2 * ((9 * Cin * Ch + Ch * 4 * Ch + 4 * Ch * 16 * Cp) * cbytes
                     + (Ch + 4 * Ch + 16 * Cp) * 4)
    itm_bytes = MT * (Ch + 4 * Ch + 2 * 16 * Cp) * 4   # f32 stage outputs (+ casts)
    step_bytes = bufs * (in_tile + out_tile) + wgt_bytes + itm_bytes + (1 << 20)
    assert step_bytes < 48 * 1024 * 1024, step_bytes   # v7x: 64 MiB physical VMEM
    vmem_limit = int(step_bytes * 1.25) if step_bytes > 24 * 1024 * 1024 else None

    def bspec(shape, imap, multi_buffer=False):
        if multi_buffer and buffer_count != 2:
            return pl.BlockSpec(shape, imap, pipeline_mode=pl.Buffered(buffer_count))
        return pl.BlockSpec(shape, imap)

    # ---- Pallas call ---------------------------------------------------------
    out_flat = pl.pallas_call(
        head_kernel,
        out_shape=jax.ShapeDtypeStruct((N, M, 16 * Cp), store_dtype),
        grid_spec=pltpu.PrefetchScalarGridSpec(
            num_scalar_prefetch=0,
            grid=(N, M // MT),
            in_specs=[
                bspec((1, MT, 9 * Cin), lambda n, m: (n, m, 0), multi_buffer=True),
                pl.BlockSpec((9 * Cin, Ch),     lambda n, m: (0, 0)),
                pl.BlockSpec((1, Ch),           lambda n, m: (0, 0)),
                pl.BlockSpec((Ch, 4 * Ch),      lambda n, m: (0, 0)),
                pl.BlockSpec((1, 4 * Ch),       lambda n, m: (0, 0)),
                pl.BlockSpec((4 * Ch, 16 * Cp), lambda n, m: (0, 0)),
                pl.BlockSpec((1, 16 * Cp),      lambda n, m: (0, 0)),
            ],
            out_specs=bspec((1, MT, 16 * Cp), lambda n, m: (n, m, 0),
                            multi_buffer=True),
        ),
        compiler_params=pltpu.CompilerParams(
            dimension_semantics=("parallel", "parallel"),
            vmem_limit_bytes=vmem_limit),
    )(x_cols, w1f, b1f, w2f, b2f, w3f, b3f)

    # ---- glue: depth-to-space (x2) + NCHW + f32 cast in one fused transpose --
    # flat channel order is (kh, kw, kh2, kw2, c_pad); output pixel is
    # (4h + 2*kh + kh2, 4w + 2*kw + kw2).  Padded channels are sliced off so
    # only Cout columns are read back; the bf16 -> f32 cast fuses here.
    out = out_flat.reshape(N, H, W, 2, 2, 2, 2, Cp)[..., :Cout]
    out = jnp.transpose(out, (0, 7, 1, 3, 5, 2, 4, 6))
    return out.reshape(N, Cout, 4 * H, 4 * W).astype(f32)        # NCHW f32


# ----------------------------------------------------------------------------
# Pure-JAX reference (same math, independent code path) for verification
# ----------------------------------------------------------------------------
def _convT_2x2_s2(x_nhwc, w, b):
    # out[n, 2h+kh, 2w+kw, o] = sum_c x[n,h,w,c] * w[c,o,kh,kw] + b[o]
    N, H, W, _ = x_nhwc.shape
    O = w.shape[1]
    z = jnp.einsum('nhwc,cokl->nhwklo', x_nhwc, w)
    z = jnp.transpose(z, (0, 1, 3, 2, 4, 5)).reshape(N, 2 * H, 2 * W, O)
    return z + b


def ref_forward(x_nchw, params, eps=1e-5):
    w1 = params["w1"]
    wt1, bt1 = params["wt1"], params["bt1"]
    wt2, bt2 = params["wt2"], params["bt2"]
    g1, be1, m1, v1 = params["bn1"]
    g2, be2, m2, v2 = params["bn2"]

    x = jnp.transpose(x_nchw, (0, 2, 3, 1))
    y = lax.conv_general_dilated(
        x, jnp.transpose(w1, (2, 3, 1, 0)), window_strides=(1, 1),
        padding="SAME", dimension_numbers=("NHWC", "HWIO", "NHWC"))
    y = jnp.maximum((y - m1) / jnp.sqrt(v1 + eps) * g1 + be1, 0.0)
    y = _convT_2x2_s2(y, wt1, bt1)
    y = jnp.maximum((y - m2) / jnp.sqrt(v2 + eps) * g2 + be2, 0.0)
    y = _convT_2x2_s2(y, wt2, bt2)
    return jnp.transpose(y, (0, 3, 1, 2))


# ----------------------------------------------------------------------------
def make_params(key, in_channels, hidden_dim, out_channels):
    ks = jax.random.split(key, 6)
    # Conv2d: module init -> normal(0, sqrt(2 / (k*k*out_ch)))
    w1 = jax.random.normal(ks[0], (hidden_dim, in_channels, 3, 3), jnp.float32) \
        * math.sqrt(2.0 / (3 * 3 * hidden_dim))
    # ConvTranspose2d weights/biases: deterministic small normals (synthetic).
    wt1 = jax.random.normal(ks[1], (hidden_dim, hidden_dim, 2, 2), jnp.float32) * 0.1
    bt1 = jax.random.normal(ks[2], (hidden_dim,), jnp.float32) * 0.1
    wt2 = jax.random.normal(ks[3], (hidden_dim, out_channels, 2, 2), jnp.float32) * 0.1
    bt2 = jax.random.normal(ks[4], (out_channels,), jnp.float32) * 0.1
    # BatchNorm: gamma=1, beta=0, running_mean=0, running_var=1 (inference fold)
    bn1 = (jnp.ones((hidden_dim,)), jnp.zeros((hidden_dim,)),
           jnp.zeros((hidden_dim,)), jnp.ones((hidden_dim,)))
    bn2 = (jnp.ones((hidden_dim,)), jnp.zeros((hidden_dim,)),
           jnp.zeros((hidden_dim,)), jnp.ones((hidden_dim,)))
    return dict(w1=w1, wt1=wt1, bt1=bt1, wt2=wt2, bt2=bt2, bn1=bn1, bn2=bn2)


if __name__ == "__main__":
    # small shapes: cfg.data.train.num_polars = 4, num_classes = 1
    N, Cin, H, W = 2, 4, 16, 16
    hidden_dim = 32
    num_classes, num_polars = 1, 4
    Cout = num_classes + num_polars

    key = jax.random.PRNGKey(0)
    kx, kp = jax.random.split(key)
    x = jax.random.normal(kx, (N, Cin, H, W), jnp.float32)
    params = make_params(kp, Cin, hidden_dim, Cout)

    ref = jax.block_until_ready(ref_forward(x, params))

    # Exact path: f32 MXU operands + f32 store, small row tile to exercise the
    # M grid axis. Reproduces the reference bit-tightly.
    out_f32 = jax.block_until_ready(
        single_det_forward(x, params, compute_dtype=jnp.float32,
                           store_dtype=jnp.float32, row_tile=64))
    assert out_f32.shape == (N, Cout, 4 * H, 4 * W), out_f32.shape
    assert jnp.allclose(out_f32, ref, rtol=1e-4, atol=1e-4), \
        float(jnp.max(jnp.abs(out_f32 - ref)))

    # Fast path (default): bf16 MXU operands + bf16 store, f32 accumulate and
    # epilogue, auto row tile (>= 4 grid steps at this N). Tolerance reflects
    # bf16 rounding of MXU operands and the output store only.
    out_fast = jax.block_until_ready(single_det_forward(x, params))
    assert out_fast.shape == (N, Cout, 4 * H, 4 * W), out_fast.shape
    err = float(jnp.max(jnp.abs(out_fast - ref)))
    assert err < 6e-2, err

    print("KERNEL_OK")
</pallas_src>

<mosaic_0001>
module attributes {stable_mosaic.version = 11 : i64} {
  func.func @head_kernel(%arg0: i32, %arg1: i32, %arg2: memref<1x64x36xf32, #tpu.memory_space<vmem>>, %arg3: memref<36x32xf32, #tpu.memory_space<vmem>>, %arg4: memref<1x32xf32, #tpu.memory_space<vmem>>, %arg5: memref<32x128xf32, #tpu.memory_space<vmem>>, %arg6: memref<1x128xf32, #tpu.memory_space<vmem>>, %arg7: memref<128x128xf32, #tpu.memory_space<vmem>>, %arg8: memref<1x128xf32, #tpu.memory_space<vmem>>, %arg9: memref<1x64x128xf32, #tpu.memory_space<vmem>>) attributes {dimension_semantics = [#tpu.dimension_semantics<parallel>, #tpu.dimension_semantics<parallel>], iteration_bounds = array<i64: 2, 4>, scalar_prefetch = 0 : i64, scratch_operands = 0 : i64, tpu.core_type = #tpu.core_type<tc>, window_params = [{transform_indices = @transform_0, window_bounds = array<i64: 1, 64, 36>}, {pipeline_mode = #tpu.pipeline_mode<synchronous>, transform_indices = @transform_1, window_bounds = array<i64: 36, 32>}, {pipeline_mode = #tpu.pipeline_mode<synchronous>, transform_indices = @transform_2, window_bounds = array<i64: 1, 32>}, {pipeline_mode = #tpu.pipeline_mode<synchronous>, transform_indices = @transform_3, window_bounds = array<i64: 32, 128>}, {pipeline_mode = #tpu.pipeline_mode<synchronous>, transform_indices = @transform_4, window_bounds = array<i64: 1, 128>}, {pipeline_mode = #tpu.pipeline_mode<synchronous>, transform_indices = @transform_5, window_bounds = array<i64: 128, 128>}, {pipeline_mode = #tpu.pipeline_mode<synchronous>, transform_indices = @transform_6, window_bounds = array<i64: 1, 128>}, {transform_indices = @transform_7, window_bounds = array<i64: 1, 64, 128>}]} {
    %c0 = arith.constant 0 : index
    %c0_0 = arith.constant 0 : index
    %c0_1 = arith.constant 0 : index
    %0 = vector.load %arg2[%c0, %c0_0, %c0_1] : memref<1x64x36xf32, #tpu.memory_space<vmem>>, vector<1x64x36xf32>
    %1 = vector.shape_cast %0 : vector<1x64x36xf32> to vector<64x36xf32>
    %c0_2 = arith.constant 0 : index
    %c0_3 = arith.constant 0 : index
    %2 = vector.load %arg3[%c0_2, %c0_3] : memref<36x32xf32, #tpu.memory_space<vmem>>, vector<36x32xf32>
    %cst = arith.constant dense<0.000000e+00> : vector<64x32xf32>
    %3 = tpu.matmul %1, %2, %cst {dimension_numbers = #tpu.dot_dimension_numbers<[1], [0], [0], [1], [0, 0, 1, 1], [], []>} : vector<64x36xf32>, vector<36x32xf32>, vector<64x32xf32> -> vector<64x32xf32>
    %c0_4 = arith.constant 0 : index
    %c0_5 = arith.constant 0 : index
    %4 = vector.load %arg4[%c0_4, %c0_5] : memref<1x32xf32, #tpu.memory_space<vmem>>, vector<1x32xf32>
    %5 = vector.broadcast %4 : vector<1x32xf32> to vector<64x32xf32>
    %6 = arith.addf %3, %5 : vector<64x32xf32>
    %cst_6 = arith.constant 0.000000e+00 : f32
    %7 = vector.broadcast %cst_6 : f32 to vector<64x32xf32>
    %8 = arith.maximumf %6, %7 : vector<64x32xf32>
    %c0_7 = arith.constant 0 : index
    %c0_8 = arith.constant 0 : index
    %9 = vector.load %arg5[%c0_7, %c0_8] : memref<32x128xf32, #tpu.memory_space<vmem>>, vector<32x128xf32>
    %cst_9 = arith.constant dense<0.000000e+00> : vector<64x128xf32>
    %10 = tpu.matmul %8, %9, %cst_9 {dimension_numbers = #tpu.dot_dimension_numbers<[1], [0], [0], [1], [0, 0, 1, 1], [], []>} : vector<64x32xf32>, vector<32x128xf32>, vector<64x128xf32> -> vector<64x128xf32>
    %c0_10 = arith.constant 0 : index
    %c0_11 = arith.constant 0 : index
    %11 = vector.load %arg6[%c0_10, %c0_11] : memref<1x128xf32, #tpu.memory_space<vmem>>, vector<1x128xf32>
    %12 = vector.broadcast %11 : vector<1x128xf32> to vector<64x128xf32>
    %13 = arith.addf %10, %12 : vector<64x128xf32>
    %cst_12 = arith.constant 0.000000e+00 : f32
    %14 = vector.broadcast %cst_12 : f32 to vector<64x128xf32>
    %15 = arith.maximumf %13, %14 : vector<64x128xf32>
    %c0_13 = arith.constant 0 : index
    %c0_14 = arith.constant 0 : index
    %16 = vector.load %arg7[%c0_13, %c0_14] : memref<128x128xf32, #tpu.memory_space<vmem>>, vector<128x128xf32>
    %cst_15 = arith.constant dense<0.000000e+00> : vector<64x128xf32>
    %17 = tpu.matmul %15, %16, %cst_15 {dimension_numbers = #tpu.dot_dimension_numbers<[1], [0], [0], [1], [0, 0, 1, 1], [], []>} : vector<64x128xf32>, vector<128x128xf32>, vector<64x128xf32> -> vector<64x128xf32>
    %c0_16 = arith.constant 0 : index
    %c0_17 = arith.constant 0 : index
    %18 = vector.load %arg8[%c0_16, %c0_17] : memref<1x128xf32, #tpu.memory_space<vmem>>, vector<1x128xf32>
    %19 = vector.broadcast %18 : vector<1x128xf32> to vector<64x128xf32>
    %20 = arith.addf %17, %19 : vector<64x128xf32>
    %c0_18 = arith.constant 0 : index
    %c0_19 = arith.constant 0 : index
    %c0_20 = arith.constant 0 : index
    %21 = vector.load %arg9[%c0_18, %c0_19, %c0_20] : memref<1x64x128xf32, #tpu.memory_space<vmem>>, vector<1x64x128xf32>
    %22 = vector.shape_cast %21 : vector<1x64x128xf32> to vector<64x128xf32>
    %23 = vector.shape_cast %20 : vector<64x128xf32> to vector<1x64x128xf32>
    tpu.vector_store %arg9[%c0_18, %c0_19, %c0_20], %23 {strides = array<i32>} : memref<1x64x128xf32, #tpu.memory_space<vmem>>, vector<1x64x128xf32>,
    return
  }
  func.func @transform_0(%arg0: i32, %arg1: i32) -> (i32, i32, i32) {
    %c0_i32 = arith.constant 0 : i32
    %c0_i32_0 = arith.constant 0 : i32
    return %arg0, %arg1, %c0_i32 : i32, i32, i32
  }
  func.func @transform_1(%arg0: i32, %arg1: i32) -> (i32, i32) {
    %c0_i32 = arith.constant 0 : i32
    %c0_i32_0 = arith.constant 0 : i32
    %c0_i32_1 = arith.constant 0 : i32
    return %c0_i32, %c0_i32_0 : i32, i32
  }
  func.func @transform_2(%arg0: i32, %arg1: i32) -> (i32, i32) {
    %c0_i32 = arith.constant 0 : i32
    %c0_i32_0 = arith.constant 0 : i32
    %c0_i32_1 = arith.constant 0 : i32
    return %c0_i32, %c0_i32_0 : i32, i32
  }
  func.func @transform_3(%arg0: i32, %arg1: i32) -> (i32, i32) {
    %c0_i32 = arith.constant 0 : i32
    %c0_i32_0 = arith.constant 0 : i32
    %c0_i32_1 = arith.constant 0 : i32
    return %c0_i32, %c0_i32_0 : i32, i32
  }
  func.func @transform_4(%arg0: i32, %arg1: i32) -> (i32, i32) {
    %c0_i32 = arith.constant 0 : i32
    %c0_i32_0 = arith.constant 0 : i32
    %c0_i32_1 = arith.constant 0 : i32
    return %c0_i32, %c0_i32_0 : i32, i32
  }
  func.func @transform_5(%arg0: i32, %arg1: i32) -> (i32, i32) {
    %c0_i32 = arith.constant 0 : i32
    %c0_i32_0 = arith.constant 0 : i32
    %c0_i32_1 = arith.constant 0 : i32
    return %c0_i32, %c0_i32_0 : i32, i32
  }
  func.func @transform_6(%arg0: i32, %arg1: i32) -> (i32, i32) {
    %c0_i32 = arith.constant 0 : i32
    %c0_i32_0 = arith.constant 0 : i32
    %c0_i32_1 = arith.constant 0 : i32
    return %c0_i32, %c0_i32_0 : i32, i32
  }
  func.func @transform_7(%arg0: i32, %arg1: i32) -> (i32, i32, i32) {
    %c0_i32 = arith.constant 0 : i32
    %c0_i32_0 = arith.constant 0 : i32
    return %arg0, %arg1, %c0_i32 : i32, i32, i32
  }
}

</mosaic_0001>

<llo_original>
// kernel: tile.40
$region0: #{tile.40}
  #allocation0 [shape = 's32[1]{0}', space=sflag, size = 0x4, scoped, tag = 'scoped memory for tile.40']
  %s0 = inlined_call_operand.vmem [shape: f32[8], index: 0, kind: input, shape index: {}]
  %s1 = inlined_call_operand.vmem [shape: f32[16,8], index: 1, kind: output, shape index: {}]
  // Predicated region
  $region2: #{tile.40} parent=0 // pred_check
    _
  $region3: #{tile.40} parent=0 // pred_check_branch
    %3 = sbr.rel (0) target = $region5
  $region4: #{tile.40} parent=0 // pred_region
    _
  $region5: #{tile.40} parent=0 // pred_fallthru
    _
  %v4 = vld [vmem:[%s0] ss:$0 sm:$0xff]
  %5 = vst [vmem:[%s1] sm:$0xff] %v4
  %s6 = scalar_lea.vmem %s1, 8
  %7 = vst [vmem:[%s6] sm:$0xff] %v4

// kernel: mul.17
$region0: #{mul.17}
  %s0 = inlined_call_operand.vmem [shape: f32[4,32], index: 0, kind: input, shape index: {}]
  %s1 = inlined_call_operand.vmem [shape: f32[128], index: 1, kind: output, shape index: {}]
  $region1: #{mul.17} parent=0
    #allocation0 [shape = 'u8[4096]{0}', space=vmem, size = 0x1000, scoped, tag = 'scoped mem for output reshape']
    #allocation1 [shape = 'u8[4096]{0}', space=vmem, size = 0x1000, scoped, tag = 'scoped mem for input reshape']
    %s3 = ssub.s32 16, 1
    %v4 = vld [vmem:[%s0] sm:%s3]
    %5 = vst [vmem:[#allocation1] sm:%s3] %v4
    %v6 = vld [vmem:[#allocation1] sm:$0x1]
    %vm7 = vcmask 261120
    %8 = vst.msk [vmem:[#allocation0] sm:$0x1] %vm7, %v6
    %s9 = scalar_lea.vmem [#allocation1], 3
    %v10 = vld [vmem:[%s9] sm:$0x1]
    %11 = vrot.lane.b32.xlu0 %v10, 96
    %v12 = vpop.permute.xlu0 %11
    %vm13 = vcmask 1048320
    %14 = vst.msk [vmem:[#allocation0] sm:$0x1] %vm13, %v12
    %s15 = scalar_lea.vmem [#allocation1], 2
    %v16 = vld [vmem:[%s15] sm:$0x1]
    %17 = vrot.lane.b32.xlu0 %v16, 64
    %v18 = vpop.permute.xlu0 %17
    %vm19 = vcmask 785920
    %20 = vst.msk [vmem:[#allocation0] sm:$0x1] %vm19, %v18
    %s21 = scalar_lea.vmem [#allocation1], 1
    %v22 = vld [vmem:[%s21] sm:$0x1]
    %23 = vrot.lane.b32.xlu0 %v22, 32
    %v24 = vpop.permute.xlu0 %23
    %vm25 = vcmask 523520
    %26 = vst.msk [vmem:[#allocation0] sm:$0x1] %vm25, %v24
    %s28 = ssub.s32 2, 1
    %v29 = vld [vmem:[#allocation0] sm:%s28]
    %s31 = ssub.s32 2, 1
    %32 = vst [vmem:[%s1] sm:%s31] %v29

// kernel: tile.41
$region0: #{tile.41}
  %s0 = inlined_call_operand.vmem [shape: f32[16,8], index: 0, kind: input, shape index: {}]
  %s1 = inlined_call_operand.vmem [shape: f32[1,128], index: 1, kind: output, shape index: {}]
  $region1: #{tile.41} parent=0
    #allocation0 [shape = 'u8[4096]{0}', space=vmem, size = 0x1000, scoped, tag = 'scoped mem for output reshape']
    %v2 = vld [vmem:[%s0] sm:$0x1]
    %vm3 = vcmask 64512
    %4 = vst.msk [vmem:[#allocation0] sm:$0x1] %vm3, %v2
    %s5 = scalar_lea.vmem %s0, 15
    %v6 = vld [vmem:[%s5] sm:$0x1]
    %7 = vrot.lane.b32.xlu0 %v6, 120
    %v8 = vpop.permute.xlu0 %7
    %vm9 = vcmask 1048512
    %10 = vst.msk [vmem:[#allocation0] sm:$0x1] %vm9, %v8
    %s11 = scalar_lea.vmem %s0, 14
    %v12 = vld [vmem:[%s11] sm:$0x1]
    %13 = vrot.lane.b32.xlu0 %v12, 112
    %v14 = vpop.permute.xlu0 %13
    %vm15 = vcmask 982912
    %16 = vst.msk [vmem:[#allocation0] sm:$0x1] %vm15, %v14
    %s17 = scalar_lea.vmem %s0, 13
    %v18 = vld [vmem:[%s17] sm:$0x1]
    %19 = vrot.lane.b32.xlu0 %v18, 104
    %v20 = vpop.permute.xlu0 %19
    %vm21 = vcmask 917312
    %22 = vst.msk [vmem:[#allocation0] sm:$0x1] %vm21, %v20
    %s23 = scalar_lea.vmem %s0, 12
    %v24 = vld [vmem:[%s23] sm:$0x1]
    %25 = vrot.lane.b32.xlu0 %v24, 96
    %v26 = vpop.permute.xlu0 %25
    %vm27 = vcmask 851712
    %28 = vst.msk [vmem:[#allocation0] sm:$0x1] %vm27, %v26
    %s29 = scalar_lea.vmem %s0, 11
    %v30 = vld [vmem:[%s29] sm:$0x1]
    %31 = vrot.lane.b32.xlu0 %v30, 88
    %v32 = vpop.permute.xlu0 %31
    %vm33 = vcmask 786112
    %34 = vst.msk [vmem:[#allocation0] sm:$0x1] %vm33, %v32
    %s35 = scalar_lea.vmem %s0, 10
    %v36 = vld [vmem:[%s35] sm:$0x1]
    %37 = vrot.lane.b32.xlu0 %v36, 80
    %v38 = vpop.permute.xlu0 %37
    %vm39 = vcmask 720512
    %40 = vst.msk [vmem:[#allocation0] sm:$0x1] %vm39, %v38
    %s41 = scalar_lea.vmem %s0, 9
    %v42 = vld [vmem:[%s41] sm:$0x1]
    %43 = vrot.lane.b32.xlu0 %v42, 72
    %v44 = vpop.permute.xlu0 %43
    %vm45 = vcmask 654912
    %46 = vst.msk [vmem:[#allocation0] sm:$0x1] %vm45, %v44
    %s47 = scalar_lea.vmem %s0, 8
    %v48 = vld [vmem:[%s47] sm:$0x1]
    %49 = vrot.lane.b32.xlu0 %v48, 64
    %v50 = vpop.permute.xlu0 %49
    %vm51 = vcmask 589312
    %52 = vst.msk [vmem:[#allocation0] sm:$0x1] %vm51, %v50
    %s53 = scalar_lea.vmem %s0, 7
    %v54 = vld [vmem:[%s53] sm:$0x1]
    %55 = vrot.lane.b32.xlu0 %v54, 56
    %v56 = vpop.permute.xlu0 %55
    %vm57 = vcmask 523712
    %58 = vst.msk [vmem:[#allocation0] sm:$0x1] %vm57, %v56
    %s59 = scalar_lea.vmem %s0, 6
    %v60 = vld [vmem:[%s59] sm:$0x1]
    %61 = vrot.lane.b32.xlu0 %v60, 48
    %v62 = vpop.permute.xlu0 %61
    %vm63 = vcmask 458112
    %64 = vst.msk [vmem:[#allocation0] sm:$0x1] %vm63, %v62
    %s65 = scalar_lea.vmem %s0, 5
    %v66 = vld [vmem:[%s65] sm:$0x1]
    %67 = vrot.lane.b32.xlu0 %v66, 40
    %v68 = vpop.permute.xlu0 %67
    %vm69 = vcmask 392512
    %70 = vst.msk [vmem:[#allocation0] sm:$0x1] %vm69, %v68
    %s71 = scalar_lea.vmem %s0, 4
    %v72 = vld [vmem:[%s71] sm:$0x1]
    %73 = vrot.lane.b32.xlu0 %v72, 32
    %v74 = vpop.permute.xlu0 %73
    %vm75 = vcmask 326912
    %76 = vst.msk [vmem:[#allocation0] sm:$0x1] %vm75, %v74
    %s77 = scalar_lea.vmem %s0, 3
    %v78 = vld [vmem:[%s77] sm:$0x1]
    %79 = vrot.lane.b32.xlu0 %v78, 24
    %v80 = vpop.permute.xlu0 %79
    %vm81 = vcmask 261312
    %82 = vst.msk [vmem:[#allocation0] sm:$0x1] %vm81, %v80
    %s83 = scalar_lea.vmem %s0, 2
    %v84 = vld [vmem:[%s83] sm:$0x1]
    %85 = vrot.lane.b32.xlu0 %v84, 16
    %v86 = vpop.permute.xlu0 %85
    %vm87 = vcmask 195712
    %88 = vst.msk [vmem:[#allocation0] sm:$0x1] %vm87, %v86
    %s89 = scalar_lea.vmem %s0, 1
    %v90 = vld [vmem:[%s89] sm:$0x1]
    %91 = vrot.lane.b32.xlu0 %v90, 8
    %v92 = vpop.permute.xlu0 %91
    %vm93 = vcmask 130112
    %94 = vst.msk [vmem:[#allocation0] sm:$0x1] %vm93, %v92
    %s96 = ssub.s32 2, 1
    %v97 = vld [vmem:[#allocation0] sm:%s96]
    %s99 = ssub.s32 2, 1
    %100 = vst [vmem:[%s1] sm:%s99] %v97

// kernel: single_det_forward.1
$region0: #{single_det_forward.1}
  #allocation0 [shape = 'u32[]', space=smem, size = 0x4, offset = 0x4, fixed_abs, tag = 'smem constant byte address 0x4 - core index']
  #allocation1 [shape = 'u32[72,128]{1,0:T(1,128)}', space=vmem, size = 0x9000, scoped, tag = 'internal scratch']
  %s0 = inlined_call_operand.vmem [shape: f32[2,256,36], index: 0, kind: input, shape index: {}]
  %s1 = inlined_call_operand.vmem [shape: f32[36,32], index: 1, kind: input, shape index: {}]
  %s2 = inlined_call_operand.vmem [shape: f32[1,32], index: 2, kind: input, shape index: {}]
  %s3 = inlined_call_operand.vmem [shape: f32[32,128], index: 3, kind: input, shape index: {}]
  %s4 = inlined_call_operand.vmem [shape: f32[1,128], index: 4, kind: input, shape index: {}]
  %s5 = inlined_call_operand.vmem [shape: f32[128,128], index: 5, kind: input, shape index: {}]
  %s6 = inlined_call_operand.vmem [shape: f32[1,128], index: 6, kind: input, shape index: {}]
  %s7 = inlined_call_operand.vmem [shape: f32[2,256,128], index: 7, kind: output, shape index: {}]
  %s8 = sld [smem:[#allocation0]]
  $region61: #{single_det_forward.1} parent=0
    _
  %s10 = ssub.s32 1, %s8
  %s11 = scalar_select 0, %s10, %s8
  loop: start=0, step=1, limit=10
  $region2: #{single_det_forward.1} parent=0 // loop_pre_header
    _
  $region3: #{single_det_forward.1} parent=0 // loop_header
    %s13 = sphi 0, %s17
    %p14 = scmp.ge.s32.totalorder %s13, 10
    %s20 = sphi 0, %s32
    %s21 = sphi 0, %s28
    %s22 = sphi 0, %s20
    %s23 = sphi 0, %s21
    %s24 = sphi 0, %s22
    %s25 = sphi 0, %s23
    %s37 = sphi 0, %s39
    %s40 = sphi 0, %s37
    %s41 = sphi 0, %s40
    %s57 = sphi 0, %s41
    %s61 = sphi 0, %s61
    %s63 = sphi 0, %s61
    %s64 = sphi 0, %s63
    %s78 = sphi 0, %s64
    %s82 = sphi 0, %s82
    %s84 = sphi 0, %s82
    %s85 = sphi 0, %s84
    %s99 = sphi 0, %s85
    %s103 = sphi 0, %s103
    %s105 = sphi 0, %s103
    %s106 = sphi 0, %s105
    %s120 = sphi 0, %s106
    %s124 = sphi 0, %s124
    %s126 = sphi 0, %s124
    %s127 = sphi 0, %s126
    %s141 = sphi 0, %s127
    %s145 = sphi 0, %s145
    %s147 = sphi 0, %s145
    %s148 = sphi 0, %s147
    %s162 = sphi 0, %s148
    %s166 = sphi 0, %s166
    %s168 = sphi 0, %s166
    %s169 = sphi 0, %s168
    %s183 = sphi 0, %s169
    %s191 = sphi 0, %s193
    %s194 = sphi 0, %s191
    %s195 = sphi 0, %s194
    %s211 = sphi 0, %s195
  $region4: #{single_det_forward.1} parent=0 // loop_header_branch
    %16 = sbr.rel (%p14) target = $region8
  $region5: #{single_det_forward.1} parent=0 // loop_body
    %s18 = ssub.s32 %s13, 1
    %s19 = ssub.s32 %s13, 2
    %s26 = sadd.s32 1, %s21
    %p27 = scmp.ge.s32.totalorder %s26, 4
    %s28 = scalar_select %p27, 0, %s26
    %s29 = sadd.s32 1, %s20
    %s30 = scalar_select %p27, %s29, %s20
    %p31 = scmp.ge.s32.totalorder %s30, 2
    %s32 = scalar_select %p31, 0, %s30
    %s33 = ssub.s32 %s20, %s32
    %s34 = ssub.s32 %s21, %s28
    %s35 = sor.u32 %s33, %s34
    %p36 = scmp.eq.s32.totalorder %s35, 0
    %s38 = sadd.s32 %s37, 1
    %s39 = scalar_select %p36, %s37, %s38
    %p42 = pneg %p36
    %p43 = scmp.eq.s32.totalorder %s13, 7
    %p44 = por %p42, %p43
    %p45 = scmp.ne.s32.totalorder %s37, %s40
    %p46 = scmp.eq.s32.totalorder %s13, 0
    %p47 = por %p45, %p46
    %p48 = scmp.ne.s32.totalorder %s37, %s40
    %p49 = scmp.eq.s32.totalorder %s18, 7
    %p50 = por %p48, %p49
    %p51 = scmp.ne.s32.totalorder %s40, %s41
    %p52 = scmp.eq.s32.totalorder %s18, 0
    %p53 = por %p51, %p52
    %p54 = scmp.ne.s32.totalorder %s40, %s41
    %p55 = scmp.eq.s32.totalorder %s19, 7
    %p56 = por %p54, %p55
    %p58 = scmp.ne.s32.totalorder %s41, %s57
    %p59 = scmp.eq.s32.totalorder %s19, 0
    %p60 = por %p58, %p59
    %s62 = sadd.s32 %s61, 1
    %p65 = scmp.eq.s32.totalorder %s13, 7
    %p66 = scmp.ne.s32.totalorder %s61, %s63
    %p67 = scmp.eq.s32.totalorder %s13, 0
    %p68 = por %p66, %p67
    %p69 = scmp.ne.s32.totalorder %s61, %s63
    %p70 = scmp.eq.s32.totalorder %s18, 7
    %p71 = por %p69, %p70
    %p72 = scmp.ne.s32.totalorder %s63, %s64
    %p73 = scmp.eq.s32.totalorder %s18, 0
    %p74 = por %p72, %p73
    %p75 = scmp.ne.s32.totalorder %s63, %s64
    %p76 = scmp.eq.s32.totalorder %s19, 7
    %p77 = por %p75, %p76
    %p79 = scmp.ne.s32.totalorder %s64, %s78
    %p80 = scmp.eq.s32.totalorder %s19, 0
    %p81 = por %p79, %p80
    %s83 = sadd.s32 %s82, 1
    %p86 = scmp.eq.s32.totalorder %s13, 7
    %p87 = scmp.ne.s32.totalorder %s82, %s84
    %p88 = scmp.eq.s32.totalorder %s13, 0
    %p89 = por %p87, %p88
    %p90 = scmp.ne.s32.totalorder %s82, %s84
    %p91 = scmp.eq.s32.totalorder %s18, 7
    %p92 = por %p90, %p91
    %p93 = scmp.ne.s32.totalorder %s84, %s85
    %p94 = scmp.eq.s32.totalorder %s18, 0
    %p95 = por %p93, %p94
    %p96 = scmp.ne.s32.totalorder %s84, %s85
    %p97 = scmp.eq.s32.totalorder %s19, 7
    %p98 = por %p96, %p97
    %p100 = scmp.ne.s32.totalorder %s85, %s99
    %p101 = scmp.eq.s32.totalorder %s19, 0
    %p102 = por %p100, %p101
    %s104 = sadd.s32 %s103, 1
    %p107 = scmp.eq.s32.totalorder %s13, 7
    %p108 = scmp.ne.s32.totalorder %s103, %s105
    %p109 = scmp.eq.s32.totalorder %s13, 0
    %p110 = por %p108, %p109
    %p111 = scmp.ne.s32.totalorder %s103, %s105
    %p112 = scmp.eq.s32.totalorder %s18, 7
    %p113 = por %p111, %p112
    %p114 = scmp.ne.s32.totalorder %s105, %s106
    %p115 = scmp.eq.s32.totalorder %s18, 0
    %p116 = por %p114, %p115
    %p117 = scmp.ne.s32.totalorder %s105, %s106
    %p118 = scmp.eq.s32.totalorder %s19, 7
    %p119 = por %p117, %p118
    %p121 = scmp.ne.s32.totalorder %s106, %s120
    %p122 = scmp.eq.s32.totalorder %s19, 0
    %p123 = por %p121, %p122
    %s125 = sadd.s32 %s124, 1
    %p128 = scmp.eq.s32.totalorder %s13, 7
    %p129 = scmp.ne.s32.totalorder %s124, %s126
    %p130 = scmp.eq.s32.totalorder %s13, 0
    %p131 = por %p129, %p130
    %p132 = scmp.ne.s32.totalorder %s124, %s126
    %p133 = scmp.eq.s32.totalorder %s18, 7
    %p134 = por %p132, %p133
    %p135 = scmp.ne.s32.totalorder %s126, %s127
    %p136 = scmp.eq.s32.totalorder %s18, 0
    %p137 = por %p135, %p136
    %p138 = scmp.ne.s32.totalorder %s126, %s127
    %p139 = scmp.eq.s32.totalorder %s19, 7
    %p140 = por %p138, %p139
    %p142 = scmp.ne.s32.totalorder %s127, %s141
    %p143 = scmp.eq.s32.totalorder %s19, 0
    %p144 = por %p142, %p143
    %s146 = sadd.s32 %s145, 1
    %p149 = scmp.eq.s32.totalorder %s13, 7
    %p150 = scmp.ne.s32.totalorder %s145, %s147
    %p151 = scmp.eq.s32.totalorder %s13, 0
    %p152 = por %p150, %p151
    %p153 = scmp.ne.s32.totalorder %s145, %s147
    %p154 = scmp.eq.s32.totalorder %s18, 7
    %p155 = por %p153, %p154
    %p156 = scmp.ne.s32.totalorder %s147, %s148
    %p157 = scmp.eq.s32.totalorder %s18, 0
    %p158 = por %p156, %p157
    %p159 = scmp.ne.s32.totalorder %s147, %s148
    %p160 = scmp.eq.s32.totalorder %s19, 7
    %p161 = por %p159, %p160
    %p163 = scmp.ne.s32.totalorder %s148, %s162
    %p164 = scmp.eq.s32.totalorder %s19, 0
    %p165 = por %p163, %p164
    %s167 = sadd.s32 %s166, 1
    %p170 = scmp.eq.s32.totalorder %s13, 7
    %p171 = scmp.ne.s32.totalorder %s166, %s168
    %p172 = scmp.eq.s32.totalorder %s13, 0
    %p173 = por %p171, %p172
    %p174 = scmp.ne.s32.totalorder %s166, %s168
    %p175 = scmp.eq.s32.totalorder %s18, 7
    %p176 = por %p174, %p175
    %p177 = scmp.ne.s32.totalorder %s168, %s169
    %p178 = scmp.eq.s32.totalorder %s18, 0
    %p179 = por %p177, %p178
    %p180 = scmp.ne.s32.totalorder %s168, %s169
    %p181 = scmp.eq.s32.totalorder %s19, 7
    %p182 = por %p180, %p181
    %p184 = scmp.ne.s32.totalorder %s169, %s183
    %p185 = scmp.eq.s32.totalorder %s19, 0
    %p186 = por %p184, %p185
    %s187 = ssub.s32 %s20, %s32
    %s188 = ssub.s32 %s21, %s28
    %s189 = sor.u32 %s187, %s188
    %p190 = scmp.eq.s32.totalorder %s189, 0
    %s192 = sadd.s32 %s191, 1
    %s193 = scalar_select %p190, %s191, %s192
    %p196 = pneg %p190
    %p197 = scmp.eq.s32.totalorder %s13, 7
    %p198 = por %p196, %p197
    %p199 = scmp.ne.s32.totalorder %s191, %s194
    %p200 = scmp.eq.s32.totalorder %s13, 0
    %p201 = por %p199, %p200
    %p202 = scmp.ne.s32.totalorder %s191, %s194
    %p203 = scmp.eq.s32.totalorder %s18, 7
    %p204 = por %p202, %p203
    %p205 = scmp.ne.s32.totalorder %s194, %s195
    %p206 = scmp.eq.s32.totalorder %s18, 0
    %p207 = por %p205, %p206
    %p208 = scmp.ne.s32.totalorder %s194, %s195
    %p209 = scmp.eq.s32.totalorder %s19, 7
    %p210 = por %p208, %p209
    %p212 = scmp.ne.s32.totalorder %s195, %s211
    %p213 = scmp.eq.s32.totalorder %s19, 0
    %p214 = por %p212, %p213
    %p215 = scmp.le.s32.totalorder 1, %s13
    %p216 = scmp.lt.s32.totalorder %s13, 9
    %p217 = pnand %p215, %p216
    %p218 = pneg %p217
    // Predicated region
    $region9: #{single_det_forward.1} parent=5 // pred_check
      _
    $region10: #{single_det_forward.1} parent=5 // pred_check_branch
      %220 = sbr.rel (%p217) target = $region12
    $region11: #{single_det_forward.1} parent=5 // pred_region
      %s221 = ssub.s32 %s13, 1
      // Predicated region
      $region13: #{single_det_forward.1} parent=11 // pred_check
        %p222 = pneg %p74
      $region14: #{single_det_forward.1} parent=11 // pred_check_branch
        %224 = sbr.rel (%p222) target = $region16
      $region15: #{single_det_forward.1} parent=11 // pred_region
        _
      $region16: #{single_det_forward.1} parent=11 // pred_fallthru
        _
      // Predicated region
      $region17: #{single_det_forward.1} parent=11 // pred_check
        %p225 = pneg %p95
      $region18: #{single_det_forward.1} parent=11 // pred_check_branch
        %227 = sbr.rel (%p225) target = $region20
      $region19: #{single_det_forward.1} parent=11 // pred_region
        _
      $region20: #{single_det_forward.1} parent=11 // pred_fallthru
        _
      // Predicated region
      $region21: #{single_det_forward.1} parent=11 // pred_check
        %p228 = pneg %p116
      $region22: #{single_det_forward.1} parent=11 // pred_check_branch
        %230 = sbr.rel (%p228) target = $region24
      $region23: #{single_det_forward.1} parent=11 // pred_region
        _
      $region24: #{single_det_forward.1} parent=11 // pred_fallthru
        _
      // Predicated region
      $region25: #{single_det_forward.1} parent=11 // pred_check
        %p231 = pneg %p137
      $region26: #{single_det_forward.1} parent=11 // pred_check_branch
        %233 = sbr.rel (%p231) target = $region28
      $region27: #{single_det_forward.1} parent=11 // pred_region
        _
      $region28: #{single_det_forward.1} parent=11 // pred_fallthru
        _
      // Predicated region
      $region29: #{single_det_forward.1} parent=11 // pred_check
        %p234 = pneg %p158
      $region30: #{single_det_forward.1} parent=11 // pred_check_branch
        %236 = sbr.rel (%p234) target = $region32
      $region31: #{single_det_forward.1} parent=11 // pred_region
        _
      $region32: #{single_det_forward.1} parent=11 // pred_fallthru
        _
      // Predicated region
      $region33: #{single_det_forward.1} parent=11 // pred_check
        %p237 = pneg %p179
      $region34: #{single_det_forward.1} parent=11 // pred_check_branch
        %239 = sbr.rel (%p237) target = $region36
      $region35: #{single_det_forward.1} parent=11 // pred_region
        _
      $region36: #{single_det_forward.1} parent=11 // pred_fallthru
        _
    $region12: #{single_det_forward.1} parent=5 // pred_fallthru
      _
    %p240 = scmp.lt.s32.totalorder %s13, 8
    // Predicated region
    $region37: #{single_det_forward.1} parent=5 // pred_check
      %p241 = pneg %p240
    $region38: #{single_det_forward.1} parent=5 // pred_check_branch
      %243 = sbr.rel (%p241) target = $region40
    $region39: #{single_det_forward.1} parent=5 // pred_region
      // Predicated region
      $region41: #{single_det_forward.1} parent=39 // pred_check
        %p244 = pneg %p47
      $region42: #{single_det_forward.1} parent=39 // pred_check_branch
        %246 = sbr.rel (%p244) target = $region44
      $region43: #{single_det_forward.1} parent=39 // pred_region
        %s247 = smul.u32 8, %s21
        %p248 = scmp.lt.s32.totalorder %s20, 1
        %s249 = scalar_select %p248, %s20, 1
        %p250 = scmp.lt.s32.totalorder %s247, 31
        %s251 = scalar_select %p250, %s247, 31
        %s252 = smul.addr %s249, 32
        %s253 = sadd.s32 %s251, %s252
        %s254 = smul.addr %s253, 8
        %s255 = scalar_lea.vmem %s0, %s254
        %s256 = smul.u32 8, %s21
      $region44: #{single_det_forward.1} parent=39 // pred_fallthru
        _
    $region40: #{single_det_forward.1} parent=5 // pred_fallthru
      _
    %p257 = scmp.le.s32.totalorder 1, %s13
    %p258 = scmp.lt.s32.totalorder %s13, 9
    %p259 = pnand %p257, %p258
    %p260 = pneg %p259
    // Predicated region
    $region45: #{single_det_forward.1} parent=5 // pred_check
      _
    $region46: #{single_det_forward.1} parent=5 // pred_check_branch
      %262 = sbr.rel (%p259) target = $region48
    $region47: #{single_det_forward.1} parent=5 // pred_region
      %s263 = ssub.s32 %s13, 1
      %s264 = smul.u32 8, %s23
      %p265 = scmp.lt.s32.totalorder %s22, 1
      %s266 = scalar_select %p265, %s22, 1
      %p267 = scmp.lt.s32.totalorder %s264, 31
      %s268 = scalar_select %p267, %s264, 31
      %s269 = smul.addr %s266, 32
      %s270 = sadd.s32 %s268, %s269
      %s271 = smul.addr %s270, 8
      %s272 = scalar_lea.vmem %s0, %s271
      %p273 = pneg %p53
      %p274 = pneg %p50
      %p275 = pneg %p74
      %p276 = pneg %p71
      %p277 = pneg %p95
      %p278 = pneg %p92
      %p279 = pneg %p116
      %p280 = pneg %p113
      %p281 = pneg %p137
      %p282 = pneg %p134
      %p283 = pneg %p158
      %p284 = pneg %p155
      %p285 = pneg %p179
      %p286 = pneg %p176
      %p287 = pneg %p207
      %p288 = pneg %p204
      %s289 = smul.u32 8, %s23
      %p290 = scmp.lt.s32.totalorder %s22, 1
      %s291 = scalar_select %p290, %s22, 1
      %p292 = scmp.lt.s32.totalorder %s289, 31
      %s293 = scalar_select %p292, %s289, 31
      %s294 = smul.addr %s291, 32
      %s295 = sadd.s32 %s293, %s294
      %s296 = smul.addr %s295, 8
      %s297 = scalar_lea.vmem %s7, %s296
      %s298 = smul.u32 8, %s23
      %p299 = scmp.lt.s32.totalorder %s22, 1
      %s300 = scalar_select %p299, %s22, 1
      %p301 = scmp.lt.s32.totalorder %s298, 31
      %s302 = scalar_select %p301, %s298, 31
      %s303 = smul.addr %s300, 32
      %s304 = sadd.s32 %s302, %s303
      %s305 = smul.addr %s304, 8
      %s306 = scalar_lea.vmem %s0, %s305
      %s307 = smul.u32 8, %s23
      %s308 = smul.u32 8, %s23
      %p309 = scmp.lt.s32.totalorder %s22, 1
      %s310 = scalar_select %p309, %s22, 1
      %p311 = scmp.lt.s32.totalorder %s308, 31
      %s312 = scalar_select %p311, %s308, 31
      %s313 = smul.addr %s310, 32
      %s314 = sadd.s32 %s312, %s313
      %s315 = smul.addr %s314, 8
      %s316 = scalar_lea.vmem %s7, %s315
      %s317 = smul.u32 8, %s23
      %v318 = vld [vmem:[%s306] sm:$0xff]
      %v319 = vld [vmem:[%s306 + $0x8] sm:$0xff]
      %v320 = vld [vmem:[%s306 + $0x10] sm:$0xff]
      %v321 = vld [vmem:[%s306 + $0x18] sm:$0xff]
      %v322 = vld [vmem:[%s306 + $0x20] sm:$0xff]
      %v323 = vld [vmem:[%s306 + $0x28] sm:$0xff]
      %v324 = vld [vmem:[%s306 + $0x30] sm:$0xff]
      %v325 = vld [vmem:[%s306 + $0x38] sm:$0xff]
      %v326 = vld [vmem:[%s1] sm:$0xff]
      %v327 = vld [vmem:[%s1 + $0x8] sm:$0xff]
      %v328 = vld [vmem:[%s1 + $0x10] sm:$0xff]
      %v329 = vld [vmem:[%s1 + $0x18] sm:$0xff]
      %v330 = vld [vmem:[%s1 + $0x20] sm:$0xf]
      %v331 = vld [vmem:[%s2] sm:$0x1]
      %v333 = vperm.slane %v331, 0
      %vm335 = vcmask 293888
      %v337 = vsel %vm335, %v318, 0
      %v340 = vsel %vm335, %v319, 0
      %v343 = vsel %vm335, %v320, 0
      %v346 = vsel %vm335, %v321, 0
      %v349 = vsel %vm335, %v322, 0
      %v352 = vsel %vm335, %v323, 0
      %v355 = vsel %vm335, %v324, 0
      %v358 = vsel %vm335, %v325, 0
      %vm360 = vcmask 1043456
      %v362 = vsel %vm360, %v330, 0
      %364 = vmatpush.msra.mxu0 0.0
      %365 = vmatpush.msra.mxu0 0.0
      %366 = vmatpush.msra.mxu0 0.0
      %367 = vmatpush.msra.mxu0 0.0
      %368 = vmatpush.msra.mxu0 0.0
      %369 = vmatpush.msra.mxu0 0.0
      %370 = vmatpush.msra.mxu0 0.0
      %371 = vmatpush.msra.mxu0 0.0
      %372 = vmatpush.msra.mxu0 0.0
      %373 = vmatpush.msra.mxu0 0.0
      %374 = vmatpush.msra.mxu0 0.0
      %375 = vmatpush.msra.mxu0 %v362
      %376 = vmatpush.msra.mxu0 %v329
      %377 = vmatpush.msra.mxu0 %v328
      %378 = vmatpush.msra.mxu0 %v327
      %379 = vmatpush.msra.mxu0 %v326
      %380 = vmatmul.f32.gmra.mxu0 %v337
      %v381 = vpop.f32.mrf.mxu0
      %v382 = vadd.f32 %v333, %v381
      %383 = vmatmul.f32.gmra.mxu0 %v340
      %v384 = vpop.f32.mrf.mxu0
      %v385 = vadd.f32 %v333, %v384
      %386 = vmatmul.f32.gmra.mxu0 %v343
      %v387 = vpop.f32.mrf.mxu0
      %v388 = vadd.f32 %v333, %v387
      %389 = vmatmul.f32.gmra.mxu0 %v346
      %v390 = vpop.f32.mrf.mxu0
      %v391 = vadd.f32 %v333, %v390
      %392 = vmatmul.f32.gmra.mxu0 %v349
      %v393 = vpop.f32.mrf.mxu0
      %v394 = vadd.f32 %v333, %v393
      %395 = vmatmul.f32.gmra.mxu0 %v352
      %v396 = vpop.f32.mrf.mxu0
      %v397 = vadd.f32 %v333, %v396
      %398 = vmatmul.f32.gmra.mxu0 %v355
      %v399 = vpop.f32.mrf.mxu0
      %v400 = vadd.f32 %v333, %v399
      %401 = vmatmul.f32.gmra.mxu0 %v358
      %v402 = vpop.f32.mrf.mxu0
      %v403 = vadd.f32 %v333, %v402
      %404 = vdwg.mxu0
      %v405 = vmax.f32 %v382, 0.0
      %v406 = vmax.f32 %v385, 0.0
      %v407 = vmax.f32 %v388, 0.0
      %v408 = vmax.f32 %v391, 0.0
      %v409 = vmax.f32 %v394, 0.0
      %v410 = vmax.f32 %v397, 0.0
      %v411 = vmax.f32 %v400, 0.0
      %v412 = vmax.f32 %v403, 0.0
      %v413 = vld [vmem:[%s3] sm:$0xff]
      %v414 = vld [vmem:[%s3 + $0x8] sm:$0xff]
      %v415 = vld [vmem:[%s3 + $0x10] sm:$0xff]
      %v416 = vld [vmem:[%s3 + $0x18] sm:$0xff]
      %v417 = vld [vmem:[%s4] sm:$0x1]
      %v419 = vperm.slane %v417, 0
      %vm421 = vcmask 261120
      %v423 = vsel %vm421, %v405, 0
      %v426 = vsel %vm421, %v406, 0
      %v429 = vsel %vm421, %v407, 0
      %v432 = vsel %vm421, %v408, 0
      %v435 = vsel %vm421, %v409, 0
      %v438 = vsel %vm421, %v410, 0
      %v441 = vsel %vm421, %v411, 0
      %v444 = vsel %vm421, %v412, 0
      %446 = vmatpush.msra.mxu0 0.0
      %447 = vmatpush.msra.mxu0 0.0
      %448 = vmatpush.msra.mxu0 0.0
      %449 = vmatpush.msra.mxu0 0.0
      %450 = vmatpush.msra.mxu0 0.0
      %451 = vmatpush.msra.mxu0 0.0
      %452 = vmatpush.msra.mxu0 0.0
      %453 = vmatpush.msra.mxu0 0.0
      %454 = vmatpush.msra.mxu0 0.0
      %455 = vmatpush.msra.mxu0 0.0
      %456 = vmatpush.msra.mxu0 0.0
      %457 = vmatpush.msra.mxu0 0.0
      %458 = vmatpush.msra.mxu0 %v416
      %459 = vmatpush.msra.mxu0 %v415
      %460 = vmatpush.msra.mxu0 %v414
      %461 = vmatpush.msra.mxu0 %v413
      %462 = vmatmul.f32.gmra.mxu0 %v423
      %v463 = vpop.f32.mrf.mxu0
      %v464 = vadd.f32 %v419, %v463
      %465 = vmatmul.f32.gmra.mxu0 %v426
      %v466 = vpop.f32.mrf.mxu0
      %v467 = vadd.f32 %v419, %v466
      %468 = vmatmul.f32.gmra.mxu0 %v429
      %v469 = vpop.f32.mrf.mxu0
      %v470 = vadd.f32 %v419, %v469
      %471 = vmatmul.f32.gmra.mxu0 %v432
      %v472 = vpop.f32.mrf.mxu0
      %v473 = vadd.f32 %v419, %v472
      %474 = vmatmul.f32.gmra.mxu0 %v435
      %v475 = vpop.f32.mrf.mxu0
      %v476 = vadd.f32 %v419, %v475
      %477 = vmatmul.f32.gmra.mxu0 %v438
      %v478 = vpop.f32.mrf.mxu0
      %v479 = vadd.f32 %v419, %v478
      %480 = vmatmul.f32.gmra.mxu0 %v441
      %v481 = vpop.f32.mrf.mxu0
      %v482 = vadd.f32 %v419, %v481
      %483 = vmatmul.f32.gmra.mxu0 %v444
      %v484 = vpop.f32.mrf.mxu0
      %v485 = vadd.f32 %v419, %v484
      %486 = vdwg.mxu0
      %v487 = vmax.f32 %v464, 0.0
      %v488 = vmax.f32 %v467, 0.0
      %v489 = vmax.f32 %v470, 0.0
      %v490 = vmax.f32 %v473, 0.0
      %v491 = vmax.f32 %v476, 0.0
      %v492 = vmax.f32 %v479, 0.0
      %v493 = vmax.f32 %v482, 0.0
      %v494 = vmax.f32 %v485, 0.0
      %v495 = vld [vmem:[%s5] sm:$0xff]
      %v496 = vld [vmem:[%s5 + $0x8] sm:$0xff]
      %v497 = vld [vmem:[%s5 + $0x10] sm:$0xff]
      %v498 = vld [vmem:[%s5 + $0x18] sm:$0xff]
      %v499 = vld [vmem:[%s5 + $0x20] sm:$0xff]
      %v500 = vld [vmem:[%s5 + $0x28] sm:$0xff]
      %v501 = vld [vmem:[%s5 + $0x30] sm:$0xff]
      %v502 = vld [vmem:[%s5 + $0x38] sm:$0xff]
      %v503 = vld [vmem:[%s5 + $0x40] sm:$0xff]
      %v504 = vld [vmem:[%s5 + $0x48] sm:$0xff]
      %v505 = vld [vmem:[%s5 + $0x50] sm:$0xff]
      %v506 = vld [vmem:[%s5 + $0x58] sm:$0xff]
      %v507 = vld [vmem:[%s5 + $0x60] sm:$0xff]
      %v508 = vld [vmem:[%s5 + $0x68] sm:$0xff]
      %v509 = vld [vmem:[%s5 + $0x70] sm:$0xff]
      %v510 = vld [vmem:[%s5 + $0x78] sm:$0xff]
      %v511 = vld [vmem:[%s6] sm:$0x1]
      %v513 = vperm.slane %v511, 0
      %515 = vmatpush.msra.mxu0 %v510
      %516 = vmatpush.msra.mxu0 %v509
      %517 = vmatpush.msra.mxu0 %v508
      %518 = vmatpush.msra.mxu0 %v507
      %519 = vmatpush.msra.mxu0 %v506
      %520 = vmatpush.msra.mxu0 %v505
      %521 = vmatpush.msra.mxu0 %v504
      %522 = vmatpush.msra.mxu0 %v503
      %523 = vmatpush.msra.mxu0 %v502
      %524 = vmatpush.msra.mxu0 %v501
      %525 = vmatpush.msra.mxu0 %v500
      %526 = vmatpush.msra.mxu0 %v499
      %527 = vmatpush.msra.mxu0 %v498
      %528 = vmatpush.msra.mxu0 %v497
      %529 = vmatpush.msra.mxu0 %v496
      %530 = vmatpush.msra.mxu0 %v495
      %531 = vmatmul.f32.gmra.mxu0 %v487
      %v532 = vpop.f32.mrf.mxu0
      %v533 = vadd.f32 %v513, %v532
      %534 = vmatmul.f32.gmra.mxu0 %v488
      %v535 = vpop.f32.mrf.mxu0
      %v536 = vadd.f32 %v513, %v535
      %537 = vmatmul.f32.gmra.mxu0 %v489
      %v538 = vpop.f32.mrf.mxu0
      %v539 = vadd.f32 %v513, %v538
      %540 = vmatmul.f32.gmra.mxu0 %v490
      %v541 = vpop.f32.mrf.mxu0
      %v542 = vadd.f32 %v513, %v541
      %543 = vmatmul.f32.gmra.mxu0 %v491
      %v544 = vpop.f32.mrf.mxu0
      %v545 = vadd.f32 %v513, %v544
      %546 = vmatmul.f32.gmra.mxu0 %v492
      %v547 = vpop.f32.mrf.mxu0
      %v548 = vadd.f32 %v513, %v547
      %549 = vmatmul.f32.gmra.mxu0 %v493
      %v550 = vpop.f32.mrf.mxu0
      %v551 = vadd.f32 %v513, %v550
      %552 = vmatmul.f32.gmra.mxu0 %v494
      %v553 = vpop.f32.mrf.mxu0
      %v554 = vadd.f32 %v513, %v553
      %555 = vdwg.mxu0
      %556 = vst [vmem:[%s316] sm:$0xff] %v533
      %557 = vst [vmem:[%s316 + $0x8] sm:$0xff] %v536
      %558 = vst [vmem:[%s316 + $0x10] sm:$0xff] %v539
      %559 = vst [vmem:[%s316 + $0x18] sm:$0xff] %v542
      %560 = vst [vmem:[%s316 + $0x20] sm:$0xff] %v545
      %561 = vst [vmem:[%s316 + $0x28] sm:$0xff] %v548
      %562 = vst [vmem:[%s316 + $0x30] sm:$0xff] %v551
      %563 = vst [vmem:[%s316 + $0x38] sm:$0xff] %v554
      %s564 = smul.u32 8, %s23
      %p565 = scmp.lt.s32.totalorder %s22, 1
      %s566 = scalar_select %p565, %s22, 1
      %p567 = scmp.lt.s32.totalorder %s564, 31
      %s568 = scalar_select %p567, %s564, 31
      %s569 = smul.addr %s566, 32
      %s570 = sadd.s32 %s568, %s569
      %s571 = smul.addr %s570, 8
      %s572 = scalar_lea.vmem %s7, %s571
      // Predicated region
      $region49: #{single_det_forward.1} parent=47 // pred_check
        %p573 = pneg %p204
      $region50: #{single_det_forward.1} parent=47 // pred_check_branch
        %575 = sbr.rel (%p573) target = $region52
      $region51: #{single_det_forward.1} parent=47 // pred_region
        %s576 = smul.u32 8, %s23
      $region52: #{single_det_forward.1} parent=47 // pred_fallthru
        _
    $region48: #{single_det_forward.1} parent=5 // pred_fallthru
      _
    %p577 = scmp.le.s32.totalorder 2, %s13
    // Predicated region
    $region53: #{single_det_forward.1} parent=5 // pred_check
      %p578 = pneg %p577
    $region54: #{single_det_forward.1} parent=5 // pred_check_branch
      %580 = sbr.rel (%p578) target = $region56
    $region55: #{single_det_forward.1} parent=5 // pred_region
      %s581 = ssub.s32 %s13, 2
      // Predicated region
      $region57: #{single_det_forward.1} parent=55 // pred_check
        %p582 = pneg %p210
      $region58: #{single_det_forward.1} parent=55 // pred_check_branch
        %584 = sbr.rel (%p582) target = $region60
      $region59: #{single_det_forward.1} parent=55 // pred_region
        %s585 = smul.u32 8, %s25
        %p586 = scmp.lt.s32.totalorder %s24, 1
        %s587 = scalar_select %p586, %s24, 1
        %p588 = scmp.lt.s32.totalorder %s585, 31
        %s589 = scalar_select %p588, %s585, 31
        %s590 = smul.addr %s587, 32
        %s591 = sadd.s32 %s589, %s590
        %s592 = smul.addr %s591, 8
        %s593 = scalar_lea.vmem %s7, %s592
      $region60: #{single_det_forward.1} parent=55 // pred_fallthru
        _
    $region56: #{single_det_forward.1} parent=5 // pred_fallthru
      _
  $region6: #{single_det_forward.1} parent=0 // loop_footer
    %s17 = sadd.s32 1, %s13
  $region7: #{single_det_forward.1} parent=0 // loop_footer_branch
    %12 = sbr.rel target = $region3
  $region8: #{single_det_forward.1} parent=0 // loop_exit
    _

</llo_original>
